<compile_context>
chip_gen: v7x
topology: tpu7x:2x2x1
jax: 0.10.0
libtpu: 0.0.40
codegen_flags: <defaults>
</compile_context>

<pallas_src>
import jax
import jax.numpy as jnp
from jax.experimental import pallas as pl
from jax.experimental.pallas import tpu as pltpu


def _conv1x1_hardsig_kernel(x_ref, w_ref, b_ref, o_ref):
    # x_ref: (bn, Cin, T)  w_ref: (Cout, Cin)  b_ref: (Cout, 1)  o_ref: (bn, Cout, T)
    bn, cin, t = x_ref.shape
    cout = o_ref.shape[1]

    w = w_ref[...]                                   # (Cout, Cin), pre-scaled by 1/6
    # Hoisted out of the loops: bias broadcast + per-channel weight columns.
    b_bcast = jnp.broadcast_to(b_ref[...], (cout, t)).astype(jnp.float32)
    w_cols = [w[:, ci:ci + 1] for ci in range(cin)]  # (Cout, 1) each

    for n in range(bn):                              # static unroll over batch block
        x = x_ref[n]                                 # (Cin, T) — spatial on lanes
        acc = b_bcast
        for ci in range(cin):                        # static unroll over Cin = 3
            # acc[co, m] += w'[co, ci] * x[ci, m]   (VPU FMA, broadcasts on both ops)
            acc = acc + w_cols[ci] * x[ci:ci + 1, :]
        # Hardsigmoid with constants folded into w'/b': clamp to [0, 1].
        o_ref[n] = jnp.clip(acc, 0.0, 1.0).astype(o_ref.dtype)


def _round_up(v, m):
    return ((v + m - 1) // m) * m


def _cdiv(a, b):
    return (a + b - 1) // b


def _choose_blocks(N, hw, max_lanes=32768):
    """Pick (bn, tile): tile is a multiple of 128 (<= max_lanes), bn divides N."""
    hw_pad = _round_up(hw, 128)
    tile = min(hw_pad, max_lanes)

    # Batch several images per step when the image is small (amortize step overhead).
    bn = 1
    if tile < max_lanes and N > 1:
        want = max(1, max_lanes // tile)
        for d in range(min(N, want), 0, -1):
            if N % d == 0:
                bn = d
                break

    # v7x megacore / pipelining: try to keep >= 2 total grid steps.
    n_batch_steps = N // bn
    n_spatial_steps = _cdiv(hw, tile)
    if n_batch_steps * n_spatial_steps < 2:
        if n_spatial_steps == 1 and hw_pad >= 256:
            tile = _round_up(_cdiv(hw_pad, 2), 128)      # split spatial in two
        elif bn > 1:
            for d in range(bn - 1, 0, -1):               # split the batch instead
                if N % d == 0:
                    bn = d
                    break
    return bn, tile


def conv1x1_hardsigmoid(x_nchw, weight, bias):
    """x_nchw: (N, Cin, H, W); weight: (Cout, Cin); bias: (Cout,)."""
    N, Cin, H, W = x_nchw.shape
    Cout = weight.shape[0]
    hw = H * W

    bn, tile = _choose_blocks(N, hw)

    # Zero-cost view: NCHW -> (N, Cin, H*W). No padding, no transposes.
    x3 = x_nchw.reshape(N, Cin, hw)

    # Fold hardsigmoid constants into the parameters (one-time O(Cin*Cout) work).
    w_fold = (weight * (1.0 / 6.0)).astype(jnp.float32)                    # (Cout, Cin)
    b_fold = ((bias + 3.0) * (1.0 / 6.0)).reshape(Cout, 1).astype(jnp.float32)

    grid = (N // bn, pl.cdiv(hw, tile))

    out3 = pl.pallas_call(
        _conv1x1_hardsig_kernel,
        out_shape=jax.ShapeDtypeStruct((N, Cout, hw), x_nchw.dtype),
        grid=grid,
        in_specs=[
            pl.BlockSpec((bn, Cin, tile), lambda n, j: (n, 0, j)),
            pl.BlockSpec((Cout, Cin), lambda n, j: (0, 0)),
            pl.BlockSpec((Cout, 1), lambda n, j: (0, 0)),
        ],
        out_specs=pl.BlockSpec((bn, Cout, tile), lambda n, j: (n, 0, j)),
        compiler_params=pltpu.CompilerParams(
            dimension_semantics=("parallel", "parallel"),
        ),
    )(x3, w_fold, b_fold)

    # Zero-cost view back to NCHW: (N, Cout, H*W) -> (N, Cout, H, W).
    return out3.reshape(N, Cout, H, W)


def reference(x_nchw, weight, bias):
    # Pure-JAX reference (1x1 conv == einsum over the channel axis).
    v1 = jnp.einsum("nchw,oc->nohw", x_nchw, weight) + bias[None, :, None, None]
    return jnp.clip(v1 + 3.0, 0.0, 6.0) / 6.0


if __name__ == "__main__":
    key = jax.random.PRNGKey(0)
    k_x, k_w, k_b, k_x2 = jax.random.split(key, 4)

    # Small shapes consistent with Conv2d(3, 8, kernel_size=1).
    N, Cin, H, W, Cout = 2, 3, 16, 16, 8
    x = jax.random.normal(k_x, (N, Cin, H, W), dtype=jnp.float32)

    # Deterministic parameter init (mimics PyTorch's uniform fan-in scaling).
    bound = 1.0 / (Cin ** 0.5)
    weight = jax.random.uniform(k_w, (Cout, Cin), jnp.float32, -bound, bound)
    bias = jax.random.uniform(k_b, (Cout,), jnp.float32, -bound, bound)

    out = jax.block_until_ready(conv1x1_hardsigmoid(x, weight, bias))
    ref = reference(x, weight, bias)
    assert out.shape == (N, Cout, H, W)
    assert jnp.allclose(out, ref, atol=1e-5, rtol=1e-5)

    # Exercise the non-multiple-of-128 spatial tail (handled in-kernel, no wrapper pad).
    H2, W2 = 10, 10
    x2 = jax.random.normal(k_x2, (N, Cin, H2, W2), dtype=jnp.float32)
    out2 = jax.block_until_ready(conv1x1_hardsigmoid(x2, weight, bias))
    ref2 = reference(x2, weight, bias)
    assert out2.shape == (N, Cout, H2, W2)
    assert jnp.allclose(out2, ref2, atol=1e-5, rtol=1e-5)

    print("KERNEL_OK")
</pallas_src>

<mosaic_0001>
module attributes {stable_mosaic.version = 11 : i64} {
  func.func @_conv1x1_hardsig_kernel(%arg0: i32, %arg1: i32, %arg2: memref<2x3x128xf32, #tpu.memory_space<vmem>>, %arg3: memref<8x3xf32, #tpu.memory_space<vmem>>, %arg4: memref<8x1xf32, #tpu.memory_space<vmem>>, %arg5: memref<2x8x128xf32, #tpu.memory_space<vmem>>) attributes {dimension_semantics = [#tpu.dimension_semantics<parallel>, #tpu.dimension_semantics<parallel>], iteration_bounds = array<i64: 1, 2>, scalar_prefetch = 0 : i64, scratch_operands = 0 : i64, tpu.core_type = #tpu.core_type<tc>, window_params = [{transform_indices = @transform_0, window_bounds = array<i64: 2, 3, 128>}, {pipeline_mode = #tpu.pipeline_mode<synchronous>, transform_indices = @transform_1, window_bounds = array<i64: 8, 3>}, {pipeline_mode = #tpu.pipeline_mode<synchronous>, transform_indices = @transform_2, window_bounds = array<i64: 8, 1>}, {transform_indices = @transform_3, window_bounds = array<i64: 2, 8, 128>}]} {
    %c0 = arith.constant 0 : index
    %c0_0 = arith.constant 0 : index
    %0 = vector.load %arg3[%c0, %c0_0] : memref<8x3xf32, #tpu.memory_space<vmem>>, vector<8x3xf32>
    %c0_1 = arith.constant 0 : index
    %c0_2 = arith.constant 0 : index
    %1 = vector.load %arg4[%c0_1, %c0_2] : memref<8x1xf32, #tpu.memory_space<vmem>>, vector<8x1xf32>
    %2 = vector.shape_cast %1 : vector<8x1xf32> to vector<8x1xf32>
    %3 = vector.broadcast %2 : vector<8x1xf32> to vector<8x128xf32>
    %4 = vector.extract_strided_slice %0 {offsets = [0, 0], sizes = [8, 1], strides = [1, 1]} : vector<8x3xf32> to vector<8x1xf32>
    %5 = vector.extract_strided_slice %0 {offsets = [0, 1], sizes = [8, 1], strides = [1, 1]} : vector<8x3xf32> to vector<8x1xf32>
    %6 = vector.extract_strided_slice %0 {offsets = [0, 2], sizes = [8, 1], strides = [1, 1]} : vector<8x3xf32> to vector<8x1xf32>
    %c0_3 = arith.constant 0 : index
    %c0_4 = arith.constant 0 : index
    %c0_5 = arith.constant 0 : index
    %7 = vector.load %arg2[%c0_3, %c0_4, %c0_5] : memref<2x3x128xf32, #tpu.memory_space<vmem>>, vector<1x3x128xf32>
    %8 = vector.shape_cast %7 : vector<1x3x128xf32> to vector<3x128xf32>
    %9 = vector.extract_strided_slice %8 {offsets = [0, 0], sizes = [1, 128], strides = [1, 1]} : vector<3x128xf32> to vector<1x128xf32>
    %10 = vector.broadcast %4 : vector<8x1xf32> to vector<8x128xf32>
    %11 = vector.broadcast %9 : vector<1x128xf32> to vector<8x128xf32>
    %12 = arith.mulf %10, %11 : vector<8x128xf32>
    %13 = arith.addf %3, %12 : vector<8x128xf32>
    %14 = vector.extract_strided_slice %8 {offsets = [1, 0], sizes = [1, 128], strides = [1, 1]} : vector<3x128xf32> to vector<1x128xf32>
    %15 = vector.broadcast %5 : vector<8x1xf32> to vector<8x128xf32>
    %16 = vector.broadcast %14 : vector<1x128xf32> to vector<8x128xf32>
    %17 = arith.mulf %15, %16 : vector<8x128xf32>
    %18 = arith.addf %13, %17 : vector<8x128xf32>
    %19 = vector.extract_strided_slice %8 {offsets = [2, 0], sizes = [1, 128], strides = [1, 1]} : vector<3x128xf32> to vector<1x128xf32>
    %20 = vector.broadcast %6 : vector<8x1xf32> to vector<8x128xf32>
    %21 = vector.broadcast %19 : vector<1x128xf32> to vector<8x128xf32>
    %22 = arith.mulf %20, %21 : vector<8x128xf32>
    %23 = arith.addf %18, %22 : vector<8x128xf32>
    %cst = arith.constant 0.000000e+00 : f32
    %cst_6 = arith.constant 1.000000e+00 : f32
    %24 = vector.broadcast %cst : f32 to vector<8x128xf32>
    %25 = arith.maximumf %24, %23 : vector<8x128xf32>
    %26 = vector.broadcast %cst_6 : f32 to vector<8x128xf32>
    %27 = arith.minimumf %26, %25 : vector<8x128xf32>
    %c0_7 = arith.constant 0 : index
    %c0_8 = arith.constant 0 : index
    %c0_9 = arith.constant 0 : index
    %28 = vector.load %arg5[%c0_7, %c0_8, %c0_9] : memref<2x8x128xf32, #tpu.memory_space<vmem>>, vector<1x8x128xf32>
    %29 = vector.shape_cast %28 : vector<1x8x128xf32> to vector<8x128xf32>
    %30 = vector.shape_cast %27 : vector<8x128xf32> to vector<1x8x128xf32>
    tpu.vector_store %arg5[%c0_7, %c0_8, %c0_9], %30 {strides = array<i32>} : memref<2x8x128xf32, #tpu.memory_space<vmem>>, vector<1x8x128xf32>,
    %c1 = arith.constant 1 : index
    %c0_10 = arith.constant 0 : index
    %c0_11 = arith.constant 0 : index
    %31 = vector.load %arg2[%c1, %c0_10, %c0_11] : memref<2x3x128xf32, #tpu.memory_space<vmem>>, vector<1x3x128xf32>
    %32 = vector.shape_cast %31 : vector<1x3x128xf32> to vector<3x128xf32>
    %33 = vector.extract_strided_slice %32 {offsets = [0, 0], sizes = [1, 128], strides = [1, 1]} : vector<3x128xf32> to vector<1x128xf32>
    %34 = vector.broadcast %4 : vector<8x1xf32> to vector<8x128xf32>
    %35 = vector.broadcast %33 : vector<1x128xf32> to vector<8x128xf32>
    %36 = arith.mulf %34, %35 : vector<8x128xf32>
    %37 = arith.addf %3, %36 : vector<8x128xf32>
    %38 = vector.extract_strided_slice %32 {offsets = [1, 0], sizes = [1, 128], strides = [1, 1]} : vector<3x128xf32> to vector<1x128xf32>
    %39 = vector.broadcast %5 : vector<8x1xf32> to vector<8x128xf32>
    %40 = vector.broadcast %38 : vector<1x128xf32> to vector<8x128xf32>
    %41 = arith.mulf %39, %40 : vector<8x128xf32>
    %42 = arith.addf %37, %41 : vector<8x128xf32>
    %43 = vector.extract_strided_slice %32 {offsets = [2, 0], sizes = [1, 128], strides = [1, 1]} : vector<3x128xf32> to vector<1x128xf32>
    %44 = vector.broadcast %6 : vector<8x1xf32> to vector<8x128xf32>
    %45 = vector.broadcast %43 : vector<1x128xf32> to vector<8x128xf32>
    %46 = arith.mulf %44, %45 : vector<8x128xf32>
    %47 = arith.addf %42, %46 : vector<8x128xf32>
    %cst_12 = arith.constant 0.000000e+00 : f32
    %cst_13 = arith.constant 1.000000e+00 : f32
    %48 = vector.broadcast %cst_12 : f32 to vector<8x128xf32>
    %49 = arith.maximumf %48, %47 : vector<8x128xf32>
    %50 = vector.broadcast %cst_13 : f32 to vector<8x128xf32>
    %51 = arith.minimumf %50, %49 : vector<8x128xf32>
    %c1_14 = arith.constant 1 : index
    %c0_15 = arith.constant 0 : index
    %c0_16 = arith.constant 0 : index
    %52 = vector.load %arg5[%c1_14, %c0_15, %c0_16] : memref<2x8x128xf32, #tpu.memory_space<vmem>>, vector<1x8x128xf32>
    %53 = vector.shape_cast %52 : vector<1x8x128xf32> to vector<8x128xf32>
    %54 = vector.shape_cast %51 : vector<8x128xf32> to vector<1x8x128xf32>
    tpu.vector_store %arg5[%c1_14, %c0_15, %c0_16], %54 {strides = array<i32>} : memref<2x8x128xf32, #tpu.memory_space<vmem>>, vector<1x8x128xf32>,
    return
  }
  func.func @transform_0(%arg0: i32, %arg1: i32) -> (i32, i32, i32) {
    %c0_i32 = arith.constant 0 : i32
    %c0_i32_0 = arith.constant 0 : i32
    return %arg0, %c0_i32, %arg1 : i32, i32, i32
  }
  func.func @transform_1(%arg0: i32, %arg1: i32) -> (i32, i32) {
    %c0_i32 = arith.constant 0 : i32
    %c0_i32_0 = arith.constant 0 : i32
    %c0_i32_1 = arith.constant 0 : i32
    return %c0_i32, %c0_i32_0 : i32, i32
  }
  func.func @transform_2(%arg0: i32, %arg1: i32) -> (i32, i32) {
    %c0_i32 = arith.constant 0 : i32
    %c0_i32_0 = arith.constant 0 : i32
    %c0_i32_1 = arith.constant 0 : i32
    return %c0_i32, %c0_i32_0 : i32, i32
  }
  func.func @transform_3(%arg0: i32, %arg1: i32) -> (i32, i32, i32) {
    %c0_i32 = arith.constant 0 : i32
    %c0_i32_0 = arith.constant 0 : i32
    return %arg0, %c0_i32, %arg1 : i32, i32, i32
  }
}

</mosaic_0001>

<llo_original>
// kernel: tpu_custom_call.1
$region0: #{tpu_custom_call.1}
  #allocation0 [shape = 'u32[]', space=smem, size = 0x4, offset = 0x4, fixed_abs, tag = 'smem constant byte address 0x4 - core index']
  #allocation1 [shape = 'u32[144,128]{1,0:T(1,128)}', space=vmem, size = 0x12000, scoped, tag = 'internal scratch']
  %s0 = inlined_call_operand.vmem [shape: f32[2,3,256], index: 0, kind: input, shape index: {}]
  %s1 = inlined_call_operand.vmem [shape: f32[8,3], index: 1, kind: input, shape index: {}]
  %s2 = inlined_call_operand.vmem [shape: f32[8,1], index: 2, kind: input, shape index: {}]
  %s3 = inlined_call_operand.hbm [shape: f32[2,8,256], index: 3, kind: output, shape index: {}]
  %s4 = sld [smem:[#allocation0]]
  $region86: #{tpu_custom_call.1} parent=0
    _
  %s6 = ssub.s32 1, %s4
  %s7 = scalar_select 0, %s6, %s4
  $region1: #{tpu_custom_call.1} parent=0
    #allocation2 [shape = 'u8[8192]{0}', space=vmem, size = 0x2000, scoped, tag = 'input window, operand 0']
    #allocation3 [shape = 'u8[16384]{0}', space=vmem, size = 0x4000, scoped, tag = 'output window, operand 0']
    #allocation4 [shape = 's32[2]{0}', space=sflag, size = 0x8, scoped, tag = 'scoped memory for tpu_custom_call.1']
    %8 = vsyncpa [#allocation4], 0
    %s9 = scalar_lea.sflag [#allocation4], 1
    %10 = vsyncpa %s9, 0
    loop: start=0, step=1, limit=4
    $region2: #{tpu_custom_call.1} parent=1 // loop_pre_header
      _
    $region3: #{tpu_custom_call.1} parent=1 // loop_header
      %s12 = sphi 0, %s16
      %p13 = scmp.ge.s32.totalorder %s12, 4
      %s19 = sphi 0, %s31
      %s20 = sphi 0, %s27
      %s21 = sphi 0, %s19
      %s22 = sphi 0, %s20
      %s23 = sphi 0, %s21
      %s24 = sphi 0, %s22
      %s36 = sphi 0, %s38
      %s39 = sphi 0, %s36
      %s40 = sphi 0, %s39
      %s56 = sphi 0, %s40
      %s60 = sphi 0, %s60
      %s62 = sphi 0, %s60
      %s63 = sphi 0, %s62
      %s77 = sphi 0, %s63
      %s81 = sphi 0, %s81
      %s83 = sphi 0, %s81
      %s84 = sphi 0, %s83
      %s98 = sphi 0, %s84
      %s106 = sphi 0, %s108
      %s109 = sphi 0, %s106
      %s110 = sphi 0, %s109
      %s126 = sphi 0, %s110
    $region4: #{tpu_custom_call.1} parent=1 // loop_header_branch
      %15 = sbr.rel (%p13) target = $region8
    $region5: #{tpu_custom_call.1} parent=1 // loop_body
      %s17 = ssub.s32 %s12, 1
      %s18 = ssub.s32 %s12, 2
      %s25 = sadd.s32 1, %s20
      %p26 = scmp.ge.s32.totalorder %s25, 2
      %s27 = scalar_select %p26, 0, %s25
      %s28 = sadd.s32 1, %s19
      %s29 = scalar_select %p26, %s28, %s19
      %p30 = scmp.ge.s32.totalorder %s29, 1
      %s31 = scalar_select %p30, 0, %s29
      %s32 = ssub.s32 %s19, %s31
      %s33 = ssub.s32 %s20, %s27
      %s34 = sor.u32 %s32, %s33
      %p35 = scmp.eq.s32.totalorder %s34, 0
      %s37 = sadd.s32 %s36, 1
      %s38 = scalar_select %p35, %s36, %s37
      %p41 = pneg %p35
      %p42 = scmp.eq.s32.totalorder %s12, 1
      %p43 = por %p41, %p42
      %p44 = scmp.ne.s32.totalorder %s36, %s39
      %p45 = scmp.eq.s32.totalorder %s12, 0
      %p46 = por %p44, %p45
      %p47 = scmp.ne.s32.totalorder %s36, %s39
      %p48 = scmp.eq.s32.totalorder %s17, 1
      %p49 = por %p47, %p48
      %p50 = scmp.ne.s32.totalorder %s39, %s40
      %p51 = scmp.eq.s32.totalorder %s17, 0
      %p52 = por %p50, %p51
      %p53 = scmp.ne.s32.totalorder %s39, %s40
      %p54 = scmp.eq.s32.totalorder %s18, 1
      %p55 = por %p53, %p54
      %p57 = scmp.ne.s32.totalorder %s40, %s56
      %p58 = scmp.eq.s32.totalorder %s18, 0
      %p59 = por %p57, %p58
      %s61 = sadd.s32 %s60, 1
      %p64 = scmp.eq.s32.totalorder %s12, 1
      %p65 = scmp.ne.s32.totalorder %s60, %s62
      %p66 = scmp.eq.s32.totalorder %s12, 0
      %p67 = por %p65, %p66
      %p68 = scmp.ne.s32.totalorder %s60, %s62
      %p69 = scmp.eq.s32.totalorder %s17, 1
      %p70 = por %p68, %p69
      %p71 = scmp.ne.s32.totalorder %s62, %s63
      %p72 = scmp.eq.s32.totalorder %s17, 0
      %p73 = por %p71, %p72
      %p74 = scmp.ne.s32.totalorder %s62, %s63
      %p75 = scmp.eq.s32.totalorder %s18, 1
      %p76 = por %p74, %p75
      %p78 = scmp.ne.s32.totalorder %s63, %s77
      %p79 = scmp.eq.s32.totalorder %s18, 0
      %p80 = por %p78, %p79
      %s82 = sadd.s32 %s81, 1
      %p85 = scmp.eq.s32.totalorder %s12, 1
      %p86 = scmp.ne.s32.totalorder %s81, %s83
      %p87 = scmp.eq.s32.totalorder %s12, 0
      %p88 = por %p86, %p87
      %p89 = scmp.ne.s32.totalorder %s81, %s83
      %p90 = scmp.eq.s32.totalorder %s17, 1
      %p91 = por %p89, %p90
      %p92 = scmp.ne.s32.totalorder %s83, %s84
      %p93 = scmp.eq.s32.totalorder %s17, 0
      %p94 = por %p92, %p93
      %p95 = scmp.ne.s32.totalorder %s83, %s84
      %p96 = scmp.eq.s32.totalorder %s18, 1
      %p97 = por %p95, %p96
      %p99 = scmp.ne.s32.totalorder %s84, %s98
      %p100 = scmp.eq.s32.totalorder %s18, 0
      %p101 = por %p99, %p100
      %s102 = ssub.s32 %s19, %s31
      %s103 = ssub.s32 %s20, %s27
      %s104 = sor.u32 %s102, %s103
      %p105 = scmp.eq.s32.totalorder %s104, 0
      %s107 = sadd.s32 %s106, 1
      %s108 = scalar_select %p105, %s106, %s107
      %p111 = pneg %p105
      %p112 = scmp.eq.s32.totalorder %s12, 1
      %p113 = por %p111, %p112
      %p114 = scmp.ne.s32.totalorder %s106, %s109
      %p115 = scmp.eq.s32.totalorder %s12, 0
      %p116 = por %p114, %p115
      %p117 = scmp.ne.s32.totalorder %s106, %s109
      %p118 = scmp.eq.s32.totalorder %s17, 1
      %p119 = por %p117, %p118
      %p120 = scmp.ne.s32.totalorder %s109, %s110
      %p121 = scmp.eq.s32.totalorder %s17, 0
      %p122 = por %p120, %p121
      %p123 = scmp.ne.s32.totalorder %s109, %s110
      %p124 = scmp.eq.s32.totalorder %s18, 1
      %p125 = por %p123, %p124
      %p127 = scmp.ne.s32.totalorder %s110, %s126
      %p128 = scmp.eq.s32.totalorder %s18, 0
      %p129 = por %p127, %p128
      %p130 = scmp.le.s32.totalorder 1, %s12
      %p131 = scmp.lt.s32.totalorder %s12, 3
      %p132 = pnand %p130, %p131
      %p133 = pneg %p132
      // Predicated region
      $region9: #{tpu_custom_call.1} parent=5 // pred_check
        _
      $region10: #{tpu_custom_call.1} parent=5 // pred_check_branch
        %135 = sbr.rel (%p132) target = $region12
      $region11: #{tpu_custom_call.1} parent=5 // pred_region
        %s136 = ssub.s32 %s12, 1
        // Predicated region
        $region13: #{tpu_custom_call.1} parent=11 // pred_check
          %p137 = pneg %p73
        $region14: #{tpu_custom_call.1} parent=11 // pred_check_branch
          %139 = sbr.rel (%p137) target = $region16
        $region15: #{tpu_custom_call.1} parent=11 // pred_region
          _
        $region16: #{tpu_custom_call.1} parent=11 // pred_fallthru
          _
        // Predicated region
        $region17: #{tpu_custom_call.1} parent=11 // pred_check
          %p140 = pneg %p94
        $region18: #{tpu_custom_call.1} parent=11 // pred_check_branch
          %142 = sbr.rel (%p140) target = $region20
        $region19: #{tpu_custom_call.1} parent=11 // pred_region
          _
        $region20: #{tpu_custom_call.1} parent=11 // pred_fallthru
          _
      $region12: #{tpu_custom_call.1} parent=5 // pred_fallthru
        _
      %p143 = scmp.lt.s32.totalorder %s12, 2
      // Predicated region
      $region21: #{tpu_custom_call.1} parent=5 // pred_check
        %p144 = pneg %p143
      $region22: #{tpu_custom_call.1} parent=5 // pred_check_branch
        %146 = sbr.rel (%p144) target = $region24
      $region23: #{tpu_custom_call.1} parent=5 // pred_region
        // Predicated region
        $region25: #{tpu_custom_call.1} parent=23 // pred_check
          %p147 = pneg %p46
        $region26: #{tpu_custom_call.1} parent=23 // pred_check_branch
          %149 = sbr.rel (%p147) target = $region28
        $region27: #{tpu_custom_call.1} parent=23 // pred_region
          %s150 = sand.u32 %s36, 1
          %s151 = sand.u32 %s36, 1
          %s152 = smul.addr %s151, 8
          %s153 = scalar_lea.vmem [#allocation2], %s152
          %s154 = smul.u32 2, %s19
          %s155 = smul.addr %s154, 2
          %s156 = sadd.s32 %s20, %s155
          %s157 = smul.addr %s156, 4
          %s158 = scalar_lea.vmem %s0, %s157
          // Predicated region
          $region29: #{tpu_custom_call.1} parent=27 // pred_check
            _
          $region30: #{tpu_custom_call.1} parent=27 // pred_check_branch
            %160 = sbr.rel (0) target = $region32
          $region31: #{tpu_custom_call.1} parent=27 // pred_region
            // Predicated region
            $region33: #{tpu_custom_call.1} parent=31 // pred_check
              _
            $region34: #{tpu_custom_call.1} parent=31 // pred_check_branch
              %162 = sbr.rel target = $region36
            $region35: #{tpu_custom_call.1} parent=31 // pred_region
              // Predicated region
              $region48: #{tpu_custom_call.1} parent=35 // pred_check
                _
              $region49: #{tpu_custom_call.1} parent=35 // pred_check_branch
                %179 = sbr.rel (0) target = $region51
              $region50: #{tpu_custom_call.1} parent=35 // pred_region
                loop: start=0, step=1, limit=1
                $region52: #{tpu_custom_call.1} parent=50 // loop_pre_header
                  _
                $region53: #{tpu_custom_call.1} parent=50 // loop_header
                  %s181 = sphi 0, %s185
                  %p182 = scmp.ge.s32.totalorder %s181, 1
                  %s186 = sphi %s158, %s158
                  %s187 = sphi %s153, %s153
                $region54: #{tpu_custom_call.1} parent=50 // loop_header_branch
                  %184 = sbr.rel (%p182) target = $region58
                $region55: #{tpu_custom_call.1} parent=50 // loop_body
                  _
                $region56: #{tpu_custom_call.1} parent=50 // loop_footer
                  %s185 = sadd.s32 1, %s181
                $region57: #{tpu_custom_call.1} parent=50 // loop_footer_branch
                  %180 = sbr.rel target = $region53
                $region58: #{tpu_custom_call.1} parent=50 // loop_exit
                  _
                loop: start=0, step=1, limit=1
                $region59: #{tpu_custom_call.1} parent=50 // loop_pre_header
                  _
                $region60: #{tpu_custom_call.1} parent=50 // loop_header
                  %s190 = sphi 0, %s194
                  %p191 = scmp.ge.s32.totalorder %s190, 1
                  %s195 = sphi %s158, %s158
                  %s196 = sphi %s153, %s153
                $region61: #{tpu_custom_call.1} parent=50 // loop_header_branch
                  %193 = sbr.rel (%p191) target = $region65
                $region62: #{tpu_custom_call.1} parent=50 // loop_body
                  %v197 = vld [vmem:[%s195] sm:$0xf]
                  %198 = vst [vmem:[%s196] sm:$0xf] %v197
                  %v199 = vld [vmem:[%s195 + $0x8] sm:$0xf]
                  %200 = vst [vmem:[%s196 + $0x4] sm:$0xf] %v199
                $region63: #{tpu_custom_call.1} parent=50 // loop_footer
                  %s194 = sadd.s32 1, %s190
                $region64: #{tpu_custom_call.1} parent=50 // loop_footer_branch
                  %189 = sbr.rel target = $region60
                $region65: #{tpu_custom_call.1} parent=50 // loop_exit
                  _
              $region51: #{tpu_custom_call.1} parent=35 // pred_fallthru
                _
            $region36: #{tpu_custom_call.1} parent=31 // pred_fallthru
              _
            // Predicated region
            $region37: #{tpu_custom_call.1} parent=31 // pred_check
              _
            $region38: #{tpu_custom_call.1} parent=31 // pred_check_branch
              %164 = sbr.rel (0) target = $region40
            $region39: #{tpu_custom_call.1} parent=31 // pred_region
              loop: start=0, step=1, limit=1
              $region41: #{tpu_custom_call.1} parent=39 // loop_pre_header
                _
              $region42: #{tpu_custom_call.1} parent=39 // loop_header
                %s167 = sphi 0, %s171
                %p168 = scmp.ge.s32.totalorder %s167, 1
                %s172 = sphi %s158, %s158
                %s173 = sphi %s153, %s153
              $region43: #{tpu_custom_call.1} parent=39 // loop_header_branch
                %170 = sbr.rel (%p168) target = $region47
              $region44: #{tpu_custom_call.1} parent=39 // loop_body
                %v174 = vld [vmem:[%s172] sm:$0xf]
                %175 = vst [vmem:[%s173] sm:$0xf] %v174
                %v176 = vld [vmem:[%s172 + $0x8] sm:$0xf]
                %177 = vst [vmem:[%s173 + $0x4] sm:$0xf] %v176
              $region45: #{tpu_custom_call.1} parent=39 // loop_footer
                %s171 = sadd.s32 1, %s167
              $region46: #{tpu_custom_call.1} parent=39 // loop_footer_branch
                %166 = sbr.rel target = $region42
              $region47: #{tpu_custom_call.1} parent=39 // loop_exit
                _
            $region40: #{tpu_custom_call.1} parent=31 // pred_fallthru
              _
          $region32: #{tpu_custom_call.1} parent=27 // pred_fallthru
            _
          %201 = vnop
        $region28: #{tpu_custom_call.1} parent=23 // pred_fallthru
          _
      $region24: #{tpu_custom_call.1} parent=5 // pred_fallthru
        _
      %p202 = scmp.le.s32.totalorder 1, %s12
      %p203 = scmp.lt.s32.totalorder %s12, 3
      %p204 = pnand %p202, %p203
      %p205 = pneg %p204
      // Predicated region
      $region66: #{tpu_custom_call.1} parent=5 // pred_check
        _
      $region67: #{tpu_custom_call.1} parent=5 // pred_check_branch
        %207 = sbr.rel (%p204) target = $region69
      $region68: #{tpu_custom_call.1} parent=5 // pred_region
        %s208 = ssub.s32 %s12, 1
        %s209 = sand.u32 %s39, 1
        %s210 = sand.u32 %s39, 1
        %s211 = smul.addr %s210, 8
        %s212 = scalar_lea.vmem [#allocation2], %s211
        // Predicated region
        $region70: #{tpu_custom_call.1} parent=68 // pred_check
          %p213 = pneg %p52
        $region71: #{tpu_custom_call.1} parent=68 // pred_check_branch
          %215 = sbr.rel (%p213) target = $region73
        $region72: #{tpu_custom_call.1} parent=68 // pred_region
          _
        $region73: #{tpu_custom_call.1} parent=68 // pred_fallthru
          _
        %s216 = sand.u32 %s39, 1
        %s217 = sand.u32 %s39, 1
        %s218 = smul.addr %s217, 8
        %s219 = scalar_lea.vmem [#allocation2], %s218
        %p220 = pneg %p52
        %p221 = pneg %p49
        %p222 = pneg %p73
        %p223 = pneg %p70
        %p224 = pneg %p94
        %p225 = pneg %p91
        %p226 = pneg %p122
        %p227 = pneg %p119
        %s228 = sand.u32 %s109, 1
        %s229 = scalar_lea.sflag [#allocation4], %s228
        %s230 = sand.u32 %s109, 1
        %s231 = smul.addr %s230, 16
        %s232 = scalar_lea.vmem [#allocation3], %s231
        %s233 = smul.u32 2, %s21
        %s234 = smul.u32 2, %s21
        %v235 = vld [vmem:[%s1] sm:$0xff]
        %v236 = vld [vmem:[%s2] sm:$0xff]
        %238 = vset.pattern.permute.xlu0 0
        %239 = vperm.xlu0 %238, %v236
        %v240 = vpop.permute.xlu0 %239
        %v242 = vld [vmem:[%s212] sm:$0x7]
        %244 = vset.pattern.permute.xlu0 0
        %245 = vperm.xlu0 %244, %v235
        %v246 = vpop.permute.xlu0 %245
        %v248 = vlaneseq
        %v249 = vshrl.u32 %v248, 7
        %v250 = vsub.s32 0, %v249
        %v251 = vrot.slane %v242, %v250
        %v252 = vmul.f32 %v246, %v251
        %v253 = vadd.f32 %v240, %v252
        %254 = vset.pattern.permute.xlu0 1
        %255 = vperm.xlu0 %254, %v235
        %v256 = vpop.permute.xlu0 %255
        %v258 = vlaneseq
        %v259 = vshrl.u32 %v258, 7
        %v260 = vsub.s32 1, %v259
        %v261 = vrot.slane %v242, %v260
        %v262 = vmul.f32 %v256, %v261
        %v263 = vadd.f32 %v253, %v262
        %264 = vset.pattern.permute.xlu0 2
        %265 = vperm.xlu0 %264, %v235
        %v266 = vpop.permute.xlu0 %265
        %v268 = vlaneseq
        %v269 = vshrl.u32 %v268, 7
        %v270 = vsub.s32 2, %v269
        %v271 = vrot.slane %v242, %v270
        %v272 = vmul.f32 %v266, %v271
        %v273 = vadd.f32 %v263, %v272
        %v274 = vmax.f32 %v273, 0.0
        %v275 = vmin.f32 %v274, 1.0
        %276 = vst [vmem:[%s232] sm:$0xff] %v275
        %s277 = scalar_lea.vmem %s212, 4 [#allocation2]
        %v278 = vld [vmem:[%s277] sm:$0x7]
        %v279 = vlaneseq
        %v280 = vshrl.u32 %v279, 7
        %v281 = vsub.s32 0, %v280
        %v282 = vrot.slane %v278, %v281
        %v283 = vmul.f32 %v246, %v282
        %v284 = vadd.f32 %v240, %v283
        %v285 = vlaneseq
        %v286 = vshrl.u32 %v285, 7
        %v287 = vsub.s32 1, %v286
        %v288 = vrot.slane %v278, %v287
        %v289 = vmul.f32 %v256, %v288
        %v290 = vadd.f32 %v284, %v289
        %v291 = vlaneseq
        %v292 = vshrl.u32 %v291, 7
        %v293 = vsub.s32 2, %v292
        %v294 = vrot.slane %v278, %v293
        %v295 = vmul.f32 %v266, %v294
        %v296 = vadd.f32 %v290, %v295
        %v297 = vmax.f32 %v296, 0.0
        %v298 = vmin.f32 %v297, 1.0
        %s299 = scalar_lea.vmem %s232, 8 [#allocation3]
        %300 = vst [vmem:[%s299] sm:$0xff] %v298
        %s301 = sand.u32 %s109, 1
        %s302 = scalar_lea.sflag [#allocation4], %s301
        %s303 = sand.u32 %s109, 1
        %s304 = smul.addr %s303, 16
        %s305 = scalar_lea.vmem [#allocation3], %s304
        // Predicated region
        $region74: #{tpu_custom_call.1} parent=68 // pred_check
          %p306 = pneg %p119
        $region75: #{tpu_custom_call.1} parent=68 // pred_check_branch
          %308 = sbr.rel (%p306) target = $region77
        $region76: #{tpu_custom_call.1} parent=68 // pred_region
          %s309 = smul.u32 2, %s21
          %s311 = ssub.s32 256, 256
          %312 = vsyncadd %s302, %s311
          %s313 = smul.addr %s309, 2
          %s314 = sadd.s32 %s22, %s313
          %s315 = smul.addr %s314, 128
          %s316 = scalar_lea.hbm %s3, %s315
          %s317 = sshll.u32 %s305, 4
          %s318 = int_to_ptr.vmem [resolvable:$true] %s317
          %323 = dma.vmem_to_hbm [thread:$0]  %s318, 256, %s316, %s302, 128, 256, 8
        $region77: #{tpu_custom_call.1} parent=68 // pred_fallthru
          _
      $region69: #{tpu_custom_call.1} parent=5 // pred_fallthru
        _
      %p324 = scmp.le.s32.totalorder 2, %s12
      // Predicated region
      $region78: #{tpu_custom_call.1} parent=5 // pred_check
        %p325 = pneg %p324
      $region79: #{tpu_custom_call.1} parent=5 // pred_check_branch
        %327 = sbr.rel (%p325) target = $region81
      $region80: #{tpu_custom_call.1} parent=5 // pred_region
        %s328 = ssub.s32 %s12, 2
        // Predicated region
        $region82: #{tpu_custom_call.1} parent=80 // pred_check
          %p329 = pneg %p125
        $region83: #{tpu_custom_call.1} parent=80 // pred_check_branch
          %331 = sbr.rel (%p329) target = $region85
        $region84: #{tpu_custom_call.1} parent=80 // pred_region
          %s332 = sand.u32 %s110, 1
          %s333 = scalar_lea.sflag [#allocation4], %s332
          %s334 = sand.u32 %s110, 1
          %s335 = smul.addr %s334, 16
          %s336 = scalar_lea.vmem [#allocation3], %s335
          %337 = dma.done %s333, 256
        $region85: #{tpu_custom_call.1} parent=80 // pred_fallthru
          _
      $region81: #{tpu_custom_call.1} parent=5 // pred_fallthru
        _
    $region6: #{tpu_custom_call.1} parent=1 // loop_footer
      %s16 = sadd.s32 1, %s12
    $region7: #{tpu_custom_call.1} parent=1 // loop_footer_branch
      %11 = sbr.rel target = $region3
    $region8: #{tpu_custom_call.1} parent=1 // loop_exit
      _
    %338 = vsyncpa [#allocation4], 1
    %s339 = scalar_lea.sflag [#allocation4], 1
    %340 = vsyncpa %s339, 1

</llo_original>
